<compile_context>
chip_gen: v5e
topology: v5e:2x2
jax: 0.10.0
libtpu: 0.0.40
codegen_flags: <defaults>
</compile_context>

<pallas_src>
import functools

import jax
import jax.numpy as jnp
from jax.experimental import pallas as pl
from jax.experimental.pallas import tpu as pltpu


def _round_up(x, m):
    return ((x + m - 1) // m) * m


def _cdiv(a, b):
    return (a + b - 1) // b


def _vmem_capacity_bytes():
    try:
        return int(pltpu.get_tpu_info().vmem_capacity_bytes)
    except Exception:
        return 64 << 20            # conservative default (v7x per-core VMEM)


def _focal_modulator(one_minus, gamma):
    g = float(gamma)
    if g == 0.0:
        return jnp.ones_like(one_minus)
    if g == 1.0:
        return one_minus
    if g == 2.0:
        return one_minus * one_minus
    if g.is_integer() and 0.0 < g <= 8.0:
        mod = one_minus
        for _ in range(int(g) - 1):
            mod = mod * one_minus
        return mod
    return one_minus ** g


def _row_stats(logits, tmask, gamma, alpha_focal):
    """Shared softmax / CE / focal math.  Returns (exps, rinv, focal)."""
    m = jnp.max(logits, axis=1, keepdims=True)          # (TB, 1)
    exps = jnp.exp(logits - m)                           # (TB, C), <= 1
    sumexp = jnp.sum(exps, axis=1, keepdims=True)        # (TB, 1)
    rinv = pl.reciprocal(sumexp, approx=True)            # EUP slot, ~free
    logit_t = jnp.sum(jnp.where(tmask, logits, 0.0), axis=1, keepdims=True)
    ce = (m + jnp.log(sumexp)) - logit_t                 # exact log-sum-exp CE
    # p_t = exp(-ce): exact (no approx reciprocal in the focal term) and a
    # single EUP exp on a (TB, 1) column instead of a (TB, C) select + XLU
    # cross-lane reduction.
    p_t = jnp.exp(-ce)
    one_minus = jnp.maximum(1.0 - p_t, 0.0)              # clamp -> no NaN pow
    focal = alpha_focal * _focal_modulator(one_minus, gamma) * ce
    return exps, rinv, focal


def _focal_taxo_matmul_kernel(logits_ref, targets_ref, d_ref, out_ref, *,
                              gamma, alpha_focal, alpha_taxo, batch_size,
                              block_b):
    tb, c = logits_ref.shape
    row_ids = pl.program_id(0) * block_b + jax.lax.broadcasted_iota(
        jnp.int32, (tb, 1), 0)
    valid = row_ids < batch_size                          # (TB, 1) bool
    # Mask ragged-tail rows BEFORE exp: the last block may contain garbage.
    logits = jnp.where(valid, logits_ref[...].astype(jnp.float32), 0.0)
    tmask = jax.lax.broadcasted_iota(jnp.int32, (tb, c), 1) == targets_ref[...]

    exps, rinv, focal = _row_stats(logits, tmask, gamma, alpha_focal)

    # Taxonomic penalty fused with the softmax: D[targets] via a one-hot MXU
    # matmul in bf16 (bf16-native MXU on v5e/v6e/v7x; one-hot selection is
    # exact, only D's bf16 rounding is introduced), f32 accumulation.
    d_i = jnp.dot(tmask.astype(jnp.bfloat16), d_ref[...].astype(jnp.bfloat16),
                  preferred_element_type=jnp.float32)     # (TB, C) == D[targets]
    taxo = jnp.sum(exps * d_i, axis=1, keepdims=True) * rinv

    loss = (focal + alpha_taxo * taxo) * valid.astype(jnp.float32)
    out_ref[...] = jnp.broadcast_to(jnp.sum(loss), out_ref.shape).astype(
        jnp.float32)


def _focal_taxo_gather_kernel(tgt_smem, logits_ref, targets_ref, d_hbm, out_ref,
                              d_rows, copy_sem, *,
                              gamma, alpha_focal, alpha_taxo, batch_size,
                              block_b):
    tb, c = logits_ref.shape
    i = pl.program_id(0)

    # Kick off TB single-row DMAs D[targets[r]] -> d_rows[r] so they overlap
    # with the softmax / focal pass below.  All copies are identical in size
    # and share one DMA semaphore, so TB waits retire them regardless of order.
    @pl.loop(0, tb)
    def _issue(r):
        idx = jnp.minimum(i * block_b + r, batch_size - 1)   # clamp ragged tail
        t = tgt_smem[idx]
        pltpu.make_async_copy(d_hbm.at[t], d_rows.at[r], copy_sem).start()

    row_ids = i * block_b + jax.lax.broadcasted_iota(jnp.int32, (tb, 1), 0)
    valid = row_ids < batch_size
    logits = jnp.where(valid, logits_ref[...].astype(jnp.float32), 0.0)
    tmask = jax.lax.broadcasted_iota(jnp.int32, (tb, c), 1) == targets_ref[...]

    exps, rinv, focal = _row_stats(logits, tmask, gamma, alpha_focal)

    @pl.loop(0, tb)
    def _wait(r):
        pltpu.make_async_copy(d_hbm.at[0], d_rows.at[r], copy_sem).wait()

    taxo = jnp.sum(exps * d_rows[...].astype(jnp.float32),
                   axis=1, keepdims=True) * rinv
    loss = (focal + alpha_taxo * taxo) * valid.astype(jnp.float32)
    out_ref[...] = jnp.broadcast_to(jnp.sum(loss), out_ref.shape).astype(
        jnp.float32)


def focal_taxo_loss(logits, targets, D, *, gamma=2.0, alpha_focal=None,
                    alpha_taxo=1.0, block_b=None, use_gather=None):
    """JAX/Pallas equivalent of FocalTaxoLoss.forward (reduction='mean').

    `logits` may be bf16 (recommended: halves the dominant HBM stream); the
    kernel casts to f32 in-register so accuracy is unchanged.
    """
    B, C = logits.shape
    logit_item = jnp.dtype(logits.dtype).itemsize
    d_item = jnp.dtype(D.dtype).itemsize
    a_focal = float(alpha_focal) if alpha_focal is not None else 1.0

    # --- generation-aware VMEM sizing (v5e/v6e: 128 MiB, v7x: 64 MiB) ---
    vmem_cap = _vmem_capacity_bytes()
    budget = max(vmem_cap - (28 << 20), vmem_cap // 2)
    limit_cap = max(vmem_cap - (8 << 20), 16 << 20)
    tb_cap = 512 if vmem_cap >= (96 << 20) else 256

    # Cost of keeping D VMEM-resident on the matmul path: Pallas double-buffers
    # every input, plus the in-kernel bf16 copy when D arrives as f32.
    d_resident = 2 * C * C * d_item + (C * C * 2 if d_item > 2 else 0)
    if use_gather is None:
        # Large C: O(TB*C) DMA row gather beats the O(TB*C^2) one-hot matmul
        # and removes the need for D to fit in VMEM (the v7x blocker).
        use_gather = (C >= 2048) or (d_resident > budget // 2)

    def _tile_bytes(tb):
        t = 2 * tb * C * logit_item       # double-buffered logits blocks
        t += 2 * tb * 128 * 4             # targets blocks (lane-padded)
        t += 5 * tb * C * 4               # in-kernel (TB, C) f32 temporaries
        if use_gather:
            t += tb * C * d_item          # gathered D-rows scratch
        return t

    resident = 0 if use_gather else d_resident

    if block_b is None:
        TB = tb_cap
        while TB > 8 and _tile_bytes(TB) + resident > budget:
            TB //= 2
        if B < TB:
            TB = _round_up(B, 8)
        # v7x has 2 TensorCores: keep >= 2 grid steps so the "parallel" axis
        # lands work on both (the extra ~0.35us step is noise on 1-TC chips).
        while TB > 8 and _cdiv(B, TB) < 2:
            TB = _round_up(TB // 2, 8)
    else:
        TB = _round_up(int(block_b), 8)
    TB = max(TB, 8)
    num_tiles = _cdiv(B, TB)

    vmem_est = _tile_bytes(TB) + resident + 2 * 8 * 128 * 4 + (1 << 20)
    vmem_limit = int(min(max(vmem_est + (4 << 20), 16 << 20), limit_cap))

    # Advisory cost estimate so XLA schedules neighbouring ops sensibly.
    mxu_flops = 0 if use_gather else 2 * B * C * C
    cost = pl.CostEstimate(
        flops=int(mxu_flops + 8 * B * C),
        transcendentals=int(B * C + 3 * B),
        bytes_accessed=int(B * C * logit_item + B * 8
                           + (B if use_gather else C) * C * d_item
                           + num_tiles * 8 * 128 * 4))

    compiler_params = pltpu.CompilerParams(
        dimension_semantics=("parallel",),    # shard tiles across v7x's 2 TCs
        vmem_limit_bytes=vmem_limit)
    out_shape = jax.ShapeDtypeStruct((num_tiles, 8, 128), jnp.float32)

    targets_i32 = targets.astype(jnp.int32)
    targets2d = targets_i32.reshape(B, 1)
    # NOTE: no wrapper-side jnp.pad of logits — ragged tails are masked in-kernel.

    if use_gather:
        kernel = functools.partial(
            _focal_taxo_gather_kernel, gamma=float(gamma), alpha_focal=a_focal,
            alpha_taxo=float(alpha_taxo), batch_size=B, block_b=TB)
        partials = pl.pallas_call(
            kernel,
            out_shape=out_shape,
            grid_spec=pltpu.PrefetchScalarGridSpec(
                num_scalar_prefetch=1,                  # targets -> SMEM
                grid=(num_tiles,),
                in_specs=[
                    pl.BlockSpec((TB, C), lambda i, tgt: (i, 0)),   # logits
                    pl.BlockSpec((TB, 1), lambda i, tgt: (i, 0)),   # targets
                    pl.BlockSpec(memory_space=pl.ANY),              # D in HBM
                ],
                out_specs=pl.BlockSpec((1, 8, 128), lambda i, tgt: (i, 0, 0)),
                scratch_shapes=[
                    pltpu.VMEM((TB, C), D.dtype),       # gathered D rows
                    pltpu.SemaphoreType.DMA(()),
                ]),
            compiler_params=compiler_params,
            cost_estimate=cost,
        )(targets_i32, logits, targets2d, D)
    else:
        kernel = functools.partial(
            _focal_taxo_matmul_kernel, gamma=float(gamma), alpha_focal=a_focal,
            alpha_taxo=float(alpha_taxo), batch_size=B, block_b=TB)
        # TODO(synk): single-buffer the constant-index D block
        # (pipeline_mode=pl.Buffered(1)) once confirmed on this toolchain; the
        # gather path already covers the large-C / v7x VMEM-pressure regime.
        partials = pl.pallas_call(
            kernel,
            out_shape=out_shape,
            grid_spec=pl.GridSpec(
                grid=(num_tiles,),
                in_specs=[
                    pl.BlockSpec((TB, C), lambda i: (i, 0)),   # logits (pipelined)
                    pl.BlockSpec((TB, 1), lambda i: (i, 0)),   # int32 targets
                    pl.BlockSpec((C, C), lambda i: (0, 0)),    # D stays resident
                ],
                out_specs=pl.BlockSpec((1, 8, 128), lambda i: (i, 0, 0)),
            ),
            compiler_params=compiler_params,
            cost_estimate=cost,
        )(logits, targets2d, D)

    # Trivial final reduction in the wrapper; mean over the *real* batch size.
    return jnp.sum(partials[:, 0, 0]) / B


def _reference(logits, targets, D, gamma=2.0, alpha_focal=None, alpha_taxo=1.0):
    """Pure-JAX reference mirroring the PyTorch module (reduction='mean')."""
    logp = jax.nn.log_softmax(logits, axis=1)
    ce = -jnp.take_along_axis(logp, targets[:, None], axis=1)[:, 0]
    p_t = jnp.exp(-ce)
    alpha = alpha_focal if alpha_focal is not None else 1.0
    fl = jnp.mean(alpha * (1.0 - p_t) ** gamma * ce)
    probs = jax.nn.softmax(logits, axis=1)
    d_i = D[targets]
    taxo = jnp.mean(jnp.sum(probs * d_i, axis=1))
    return fl + alpha_taxo * taxo


if __name__ == "__main__":
    key = jax.random.PRNGKey(0)

    def make_D(k, C):
        raw = jax.random.uniform(k, (C, C), dtype=jnp.float32)
        Dm = 0.5 * (raw + raw.T)
        return Dm * (1.0 - jnp.eye(C, dtype=jnp.float32))

    gamma, alpha_focal, alpha_taxo = 2.0, None, 1.0
    # Tolerance covers bf16 rounding of D on the MXU path and the EUP
    # approximate reciprocal feeding the taxo term.
    TOL = 2e-2

    # 1) Matmul (VMEM-resident D) path, single tile.
    B, C = 8, 16
    k1, k2, k3, k4 = jax.random.split(key, 4)
    logits = jax.random.normal(k1, (B, C), dtype=jnp.float32) * 2.0
    targets = jax.random.randint(k2, (B,), 0, C, dtype=jnp.int32)
    D = make_D(k3, C)
    loss = jax.block_until_ready(
        focal_taxo_loss(logits, targets, D, gamma=gamma,
                        alpha_focal=alpha_focal, alpha_taxo=alpha_taxo))
    ref = _reference(logits, targets, D, gamma, alpha_focal, alpha_taxo)
    assert jnp.allclose(loss, ref, rtol=TOL, atol=TOL), (loss, ref)

    # 2) Matmul path, multi-tile with a ragged tail (no wrapper-side padding).
    B2 = 20
    k5, k6 = jax.random.split(k4)
    logits2 = jax.random.normal(k5, (B2, C), dtype=jnp.float32) * 2.0
    targets2 = jax.random.randint(k6, (B2,), 0, C, dtype=jnp.int32)
    loss2 = jax.block_until_ready(
        focal_taxo_loss(logits2, targets2, D, gamma=gamma,
                        alpha_focal=alpha_focal, alpha_taxo=alpha_taxo,
                        block_b=8))
    ref2 = _reference(logits2, targets2, D, gamma, alpha_focal, alpha_taxo)
    assert jnp.allclose(loss2, ref2, rtol=TOL, atol=TOL), (loss2, ref2)

    # 3) Scalar-prefetched DMA row-gather path (the large-C / v7x config),
    #    forced at a small lane-aligned shape so it is exercised here,
    #    including a ragged tail.
    B3, C3 = 20, 128
    k7, k8, k9 = jax.random.split(k5, 3)
    logits3 = jax.random.normal(k7, (B3, C3), dtype=jnp.float32) * 2.0
    targets3 = jax.random.randint(k8, (B3,), 0, C3, dtype=jnp.int32)
    D3 = make_D(k9, C3)
    loss3 = jax.block_until_ready(
        focal_taxo_loss(logits3, targets3, D3, gamma=gamma,
                        alpha_focal=alpha_focal, alpha_taxo=alpha_taxo,
                        block_b=8, use_gather=True))
    ref3 = _reference(logits3, targets3, D3, gamma, alpha_focal, alpha_taxo)
    assert jnp.allclose(loss3, ref3, rtol=TOL, atol=TOL), (loss3, ref3)

    print("KERNEL_OK")
</pallas_src>

<mosaic_0001>
module attributes {stable_mosaic.version = 11 : i64} {
  func.func @_focal_taxo_matmul_kernel(%arg0: i32, %arg1: memref<8x16xf32, #tpu.memory_space<vmem>>, %arg2: memref<8x1xi32, #tpu.memory_space<vmem>>, %arg3: memref<16x16xf32, #tpu.memory_space<vmem>>, %arg4: memref<1x8x128xf32, #tpu.memory_space<vmem>>) attributes {dimension_semantics = [#tpu.dimension_semantics<parallel>], iteration_bounds = array<i64: 1>, scalar_prefetch = 0 : i64, scratch_operands = 0 : i64, tpu.core_type = #tpu.core_type<tc>, window_params = [{transform_indices = @transform_0, window_bounds = array<i64: 8, 16>}, {transform_indices = @transform_1, window_bounds = array<i64: 8, 1>}, {pipeline_mode = #tpu.pipeline_mode<synchronous>, transform_indices = @transform_2, window_bounds = array<i64: 16, 16>}, {transform_indices = @transform_3, window_bounds = array<i64: 1, 8, 128>}]} {
    %c8_i32 = arith.constant 8 : i32
    %0 = arith.muli %arg0, %c8_i32 : i32
    %1 = tpu.iota {dimensions = array<i32: 0>} : vector<8x1xi32>
    %2 = vector.broadcast %0 : i32 to vector<8x1xi32>
    %3 = arith.addi %2, %1 : vector<8x1xi32>
    %c8_i32_0 = arith.constant 8 : i32
    %4 = vector.broadcast %c8_i32_0 : i32 to vector<8x1xi32>
    %5 = arith.cmpi slt, %3, %4 : vector<8x1xi32>
    %c0 = arith.constant 0 : index
    %c0_1 = arith.constant 0 : index
    %6 = vector.load %arg1[%c0, %c0_1] : memref<8x16xf32, #tpu.memory_space<vmem>>, vector<8x16xf32>
    %cst = arith.constant 0.000000e+00 : f32
    %7 = vector.shape_cast %5 : vector<8x1xi1> to vector<8x1xi1>
    %8 = vector.broadcast %7 : vector<8x1xi1> to vector<8x16xi1>
    %9 = vector.broadcast %cst : f32 to vector<8x16xf32>
    %10 = arith.select %8, %6, %9 : vector<8x16xi1>, vector<8x16xf32>
    %11 = tpu.iota {dimensions = array<i32: 1>} : vector<8x16xi32>
    %c0_2 = arith.constant 0 : index
    %c0_3 = arith.constant 0 : index
    %12 = vector.load %arg2[%c0_2, %c0_3] : memref<8x1xi32, #tpu.memory_space<vmem>>, vector<8x1xi32>
    %13 = vector.broadcast %12 : vector<8x1xi32> to vector<8x16xi32>
    %14 = arith.cmpi eq, %11, %13 : vector<8x16xi32>
    %cst_4 = arith.constant dense<0xFF800000> : vector<8xf32>
    %15 = vector.multi_reduction <maximumf>, %10, %cst_4 [1] : vector<8x16xf32> to vector<8xf32>
    %16 = vector.shape_cast %15 : vector<8xf32> to vector<8x1xf32>
    %17 = vector.broadcast %16 : vector<8x1xf32> to vector<8x16xf32>
    %18 = arith.subf %10, %17 : vector<8x16xf32>
    %19 = math.exp %18 : vector<8x16xf32>
    %cst_5 = arith.constant dense<0.000000e+00> : vector<8xf32>
    %20 = vector.multi_reduction <add>, %19, %cst_5 [1] : vector<8x16xf32> to vector<8xf32>
    %21 = vector.shape_cast %20 : vector<8xf32> to vector<8x1xf32>
    %22 = tpu.reciprocal %21 {approx = true} : vector<8x1xf32> -> vector<8x1xf32>
    %cst_6 = arith.constant 0.000000e+00 : f32
    %23 = vector.broadcast %cst_6 : f32 to vector<8x16xf32>
    %24 = arith.select %14, %10, %23 : vector<8x16xi1>, vector<8x16xf32>
    %cst_7 = arith.constant dense<0.000000e+00> : vector<8xf32>
    %25 = vector.multi_reduction <add>, %24, %cst_7 [1] : vector<8x16xf32> to vector<8xf32>
    %26 = vector.shape_cast %25 : vector<8xf32> to vector<8x1xf32>
    %27 = math.log %21 : vector<8x1xf32>
    %28 = arith.addf %16, %27 : vector<8x1xf32>
    %29 = arith.subf %28, %26 : vector<8x1xf32>
    %cst_8 = arith.constant 0.000000e+00 : f32
    %30 = vector.broadcast %cst_8 : f32 to vector<8x1xf32>
    %31 = arith.subf %30, %29 : vector<8x1xf32>
    %32 = math.exp %31 : vector<8x1xf32>
    %cst_9 = arith.constant 1.000000e+00 : f32
    %33 = vector.broadcast %cst_9 : f32 to vector<8x1xf32>
    %34 = arith.subf %33, %32 : vector<8x1xf32>
    %cst_10 = arith.constant 0.000000e+00 : f32
    %35 = vector.broadcast %cst_10 : f32 to vector<8x1xf32>
    %36 = arith.maximumf %34, %35 : vector<8x1xf32>
    %37 = arith.mulf %36, %36 : vector<8x1xf32>
    %cst_11 = arith.constant 1.000000e+00 : f32
    %38 = vector.broadcast %cst_11 : f32 to vector<8x1xf32>
    %39 = arith.mulf %38, %37 : vector<8x1xf32>
    %40 = arith.mulf %39, %29 : vector<8x1xf32>
    %41 = arith.extui %14 : vector<8x16xi1> to vector<8x16xi32>
    %42 = arith.sitofp %41 : vector<8x16xi32> to vector<8x16xf32>
    %43 = arith.truncf %42 : vector<8x16xf32> to vector<8x16xbf16>
    %c0_12 = arith.constant 0 : index
    %c0_13 = arith.constant 0 : index
    %44 = vector.load %arg3[%c0_12, %c0_13] : memref<16x16xf32, #tpu.memory_space<vmem>>, vector<16x16xf32>
    %45 = arith.truncf %44 : vector<16x16xf32> to vector<16x16xbf16>
    %cst_14 = arith.constant dense<0.000000e+00> : vector<8x16xf32>
    %46 = tpu.matmul %43, %45, %cst_14 {dimension_numbers = #tpu.dot_dimension_numbers<[1], [0], [0], [1], [0, 0, 1, 1], [], []>} : vector<8x16xbf16>, vector<16x16xbf16>, vector<8x16xf32> -> vector<8x16xf32>
    %47 = arith.mulf %19, %46 : vector<8x16xf32>
    %cst_15 = arith.constant dense<0.000000e+00> : vector<8xf32>
    %48 = vector.multi_reduction <add>, %47, %cst_15 [1] : vector<8x16xf32> to vector<8xf32>
    %49 = vector.shape_cast %48 : vector<8xf32> to vector<8x1xf32>
    %50 = arith.mulf %49, %22 : vector<8x1xf32>
    %cst_16 = arith.constant 1.000000e+00 : f32
    %51 = vector.broadcast %cst_16 : f32 to vector<8x1xf32>
    %52 = arith.mulf %51, %50 : vector<8x1xf32>
    %53 = arith.addf %40, %52 : vector<8x1xf32>
    %54 = arith.extui %5 : vector<8x1xi1> to vector<8x1xi32>
    %55 = arith.sitofp %54 : vector<8x1xi32> to vector<8x1xf32>
    %56 = arith.mulf %53, %55 : vector<8x1xf32>
    %57 = vector.shape_cast %56 : vector<8x1xf32> to vector<1x8x1xf32>
    %cst_17 = arith.constant dense<0.000000e+00> : vector<1xf32>
    %58 = vector.multi_reduction <add>, %57, %cst_17 [1, 2] : vector<1x8x1xf32> to vector<1xf32>
    %59 = vector.shape_cast %58 : vector<1xf32> to vector<1x1x1xf32>
    %60 = vector.extract %59[0, 0, 0] : f32 from vector<1x1x1xf32>
    %61 = vector.broadcast %60 : f32 to vector<1x8x128xf32>
    %c0_18 = arith.constant 0 : index
    %c0_19 = arith.constant 0 : index
    %c0_20 = arith.constant 0 : index
    %62 = vector.load %arg4[%c0_18, %c0_19, %c0_20] : memref<1x8x128xf32, #tpu.memory_space<vmem>>, vector<1x8x128xf32>
    tpu.vector_store %arg4[%c0_18, %c0_19, %c0_20], %61 {strides = array<i32>} : memref<1x8x128xf32, #tpu.memory_space<vmem>>, vector<1x8x128xf32>,
    return
  }
  func.func @transform_0(%arg0: i32) -> (i32, i32) {
    %c0_i32 = arith.constant 0 : i32
    %c0_i32_0 = arith.constant 0 : i32
    return %arg0, %c0_i32 : i32, i32
  }
  func.func @transform_1(%arg0: i32) -> (i32, i32) {
    %c0_i32 = arith.constant 0 : i32
    %c0_i32_0 = arith.constant 0 : i32
    return %arg0, %c0_i32 : i32, i32
  }
  func.func @transform_2(%arg0: i32) -> (i32, i32) {
    %c0_i32 = arith.constant 0 : i32
    %c0_i32_0 = arith.constant 0 : i32
    %c0_i32_1 = arith.constant 0 : i32
    return %c0_i32, %c0_i32_0 : i32, i32
  }
  func.func @transform_3(%arg0: i32) -> (i32, i32, i32) {
    %c0_i32 = arith.constant 0 : i32
    %c0_i32_0 = arith.constant 0 : i32
    %c0_i32_1 = arith.constant 0 : i32
    return %arg0, %c0_i32, %c0_i32_0 : i32, i32, i32
  }
}

</mosaic_0001>

<llo_original>
// kernel: tpu_custom_call.1
$region0: #{tpu_custom_call.1}
  #allocation0 [shape = 'u32[]', space=smem, size = 0x4, offset = 0x4, fixed_abs, tag = 'smem constant byte address 0x4 - core index']
  #allocation1 [shape = 'u32[72,128]{1,0:T(1,128)}', space=vmem, size = 0x9000, scoped, tag = 'internal scratch']
  %s0 = inlined_call_operand.vmem [shape: f32[8,16], index: 0, kind: input, shape index: {}]
  %s1 = inlined_call_operand.vmem [shape: s32[8,1], index: 1, kind: input, shape index: {}]
  %s2 = inlined_call_operand.hbm [shape: f32[16,16], index: 2, kind: input, shape index: {}]
  %s3 = inlined_call_operand.hbm [shape: f32[1,8,128], index: 3, kind: output, shape index: {}]
  %s4 = sld [smem:[#allocation0]]
  $region26: #{tpu_custom_call.1} parent=0
    _
  %s6 = ssub.s32 1, %s4
  %s7 = scalar_select 0, %s6, %s4
  $region1: #{tpu_custom_call.1} parent=0
    #allocation2 [shape = 'u8[8192]{0}', space=vmem, size = 0x2000, scoped, tag = 'input window, operand 2, single buffered']
    #allocation3 [shape = 's32[1]{0}', space=sflag, size = 0x4, scoped, tag = 'scoped memory for tpu_custom_call.1']
    #allocation4 [shape = 's32[1]{0}', space=sflag, size = 0x4, scoped, tag = 'scoped memory for tpu_custom_call.1']
    #allocation5 [shape = 'u8[4096]{0}', space=vmem, size = 0x1000, scoped, tag = 'output window, operand 0, single buffered']
    %8 = vsyncpa [#allocation3], 0
    %9 = vsyncpa [#allocation4], 0
    // Predicated region
    $region2: #{tpu_custom_call.1} parent=1 // pred_check
      _
    $region3: #{tpu_custom_call.1} parent=1 // pred_check_branch
      %11 = sbr.rel (0) target = $region5
    $region4: #{tpu_custom_call.1} parent=1 // pred_region
      _
    $region5: #{tpu_custom_call.1} parent=1 // pred_fallthru
      _
    // Predicated region
    $region6: #{tpu_custom_call.1} parent=1 // pred_check
      _
    $region7: #{tpu_custom_call.1} parent=1 // pred_check_branch
      %13 = sbr.rel (0) target = $region9
    $region8: #{tpu_custom_call.1} parent=1 // pred_region
      _
    $region9: #{tpu_custom_call.1} parent=1 // pred_fallthru
      _
    // Predicated region
    $region10: #{tpu_custom_call.1} parent=1 // pred_check
      _
    $region11: #{tpu_custom_call.1} parent=1 // pred_check_branch
      %15 = sbr.rel (0) target = $region13
    $region12: #{tpu_custom_call.1} parent=1 // pred_region
      %17 = vsyncadd [#allocation3], 0
      %s18 = sshll.u32 %s2, 4
      %s19 = int_to_ptr.hbm [resolvable:$true] %s18
      %s20 = sshll.u32 [#allocation2], 4
      %s21 = int_to_ptr.vmem [resolvable:$true] %s20
      %26 = dma.hbm_to_vmem [thread:$0]  %s19, 256, %s21, [#allocation3], 128, 128, 8
    $region13: #{tpu_custom_call.1} parent=1 // pred_fallthru
      _
    // Predicated region
    $region14: #{tpu_custom_call.1} parent=1 // pred_check
      _
    $region15: #{tpu_custom_call.1} parent=1 // pred_check_branch
      %28 = sbr.rel (0) target = $region17
    $region16: #{tpu_custom_call.1} parent=1 // pred_region
      %30 = dma.done [#allocation3], 256
    $region17: #{tpu_custom_call.1} parent=1 // pred_fallthru
      _
    %s32 = smul.u32 0, 8
    %v33 = vlaneseq
    %v34 = vshrl.u32 %v33, 7
    %v35 = vstv %s32
    %v36 = vadd.s32 %v35, %v34
    %vm37 = vcmp.lt.s32.totalorder %v36, 8
    %v38 = vld [vmem:[%s0] sm:$0xff]
    %v39 = vsel %vm37, 1, 0
    %vm40 = vcmp.eq.s32.totalorder %v39, 1
    %v41 = vsel %vm40, %v38, 0.0
    %v42 = vlaneseq
    %v43 = vand.u32 %v42, 127
    %v44 = vld [vmem:[%s1] sm:$0xff]
    %45 = vset.pattern.permute.xlu0 0
    %46 = vperm.xlu0 %45, %v44
    %v47 = vpop.permute.xlu0 %46
    %vm48 = vcmp.eq.s32.totalorder %v43, %v47
    %vm49 = vcmask 130048
    %v50 = vsel %vm49, %v41, -inf
    %51 = vmax.xlane.f32.xlu0 %v50
    %v52 = vpop.xlane.xlu0 %51
    %v53 = vsub.f32 %v41, %v52
    %v54 = vmul.f32 %v53, 1.442695
    %v55 = vpow.pop %v54
    %v56 = vsel %vm49, %v55, 0.0
    %57 = vadd.xlane.f32.xlu0 %v56
    %v58 = vpop.xlane.xlu0 %57
    %v59 = vrcp.pop %v58
    %v60 = vsel %vm48, %v41, 0.0
    %v61 = vsel %vm49, %v60, 0.0
    %62 = vadd.xlane.f32.xlu0 %v61
    %v63 = vpop.xlane.xlu0 %62
    %v64 = vlog2.pop %v58
    %v65 = vmul.f32 %v64, 0.6931472
    %v66 = vadd.f32 %v52, %v65
    %v67 = vsub.f32 %v66, %v63
    %v68 = vsub.f32 0.0, %v67
    %v69 = vmul.f32 %v68, 1.442695
    %v70 = vpow.pop %v69
    %v71 = vsub.f32 1.0, %v70
    %v72 = vmax.f32 %v71, 0.0
    %v73 = vmul.f32 %v72, %v72
    %v74 = vmul.f32 %v73, %v67
    %v75 = vsel %vm48, 1, 0
    %v76 = vcvt.s32.f32 %v75
    %v77 = vpack.c.bf16 %v76, %v76
    %v78 = vld [vmem:[#allocation2] sm:$0xff]
    %v79 = vld [vmem:[#allocation2 + $0x8] sm:$0xff]
    %v80 = vpack.c.bf16 %v79, %v78
    %v82 = vsel %vm49, %v77, 0
    %84 = vmatpush.bf16.msra.mxu0 0
    %85 = vmatpush.bf16.msra.mxu0 0
    %86 = vmatpush.bf16.msra.mxu0 0
    %87 = vmatpush.bf16.msra.mxu0 0
    %88 = vmatpush.bf16.msra.mxu0 0
    %89 = vmatpush.bf16.msra.mxu0 0
    %90 = vmatpush.bf16.msra.mxu0 0
    %91 = vmatpush.bf16.msra.mxu0 %v80
    %92 = vmatmul.bf16.gmra.mxu0 %v82
    %v93 = vpop.f32.mrf.mxu0
    %v94 = vadd.f32 0.0, %v93
    %v95 = vpop.f32.mrf.mxu0
    %96 = vdwg.mxu0
    %v97 = vmul.f32 %v55, %v94
    %v98 = vsel %vm49, %v97, 0.0
    %99 = vadd.xlane.f32.xlu0 %v98
    %v100 = vpop.xlane.xlu0 %99
    %v101 = vmul.f32 %v100, %v59
    %v102 = vadd.f32 %v74, %v101
    %v103 = vcvt.s32.f32 %v39
    %v104 = vmul.f32 %v102, %v103
    %vm105 = vcmask 7168
    %v106 = vsel %vm105, %v104, 0.0
    %107 = vadd.xlane.f32.xlu0 %v106
    %v108 = vpop.xlane.xlu0 %107
    %v109 = vrot.slane %v108, 4
    %v110 = vadd.f32 %v108, %v109
    %v111 = vrot.slane %v110, 2
    %v112 = vadd.f32 %v110, %v111
    %v113 = vrot.slane %v112, 1
    %v114 = vadd.f32 %v112, %v113
    %s115 = vtos %v114
    %v116 = vstv %s115
    %117 = vst [vmem:[#allocation5] sm:$0xff] %v116
    // Predicated region
    $region18: #{tpu_custom_call.1} parent=1 // pred_check
      _
    $region19: #{tpu_custom_call.1} parent=1 // pred_check_branch
      %119 = sbr.rel (0) target = $region21
    $region20: #{tpu_custom_call.1} parent=1 // pred_region
      %121 = vsyncadd [#allocation4], 0
      %s123 = sshll.u32 [#allocation5], 4
      %s124 = int_to_ptr.vmem [resolvable:$true] %s123
      %s125 = sshll.u32 %s3, 4
      %s126 = int_to_ptr.hbm [resolvable:$true] %s125
      %128 = dma.vmem_to_hbm [thread:$0]  %s124, 128, %s126, [#allocation4]
    $region21: #{tpu_custom_call.1} parent=1 // pred_fallthru
      _
    // Predicated region
    $region22: #{tpu_custom_call.1} parent=1 // pred_check
      _
    $region23: #{tpu_custom_call.1} parent=1 // pred_check_branch
      %130 = sbr.rel (0) target = $region25
    $region24: #{tpu_custom_call.1} parent=1 // pred_region
      %132 = dma.done [#allocation4], 128
    $region25: #{tpu_custom_call.1} parent=1 // pred_fallthru
      _
    %133 = vsyncpa [#allocation3], 1
    %134 = vsyncpa [#allocation4], 1

</llo_original>
